<compile_context>
chip_gen: v5e
topology: v5e:2x2
jax: 0.10.0
libtpu: 0.0.40
codegen_flags: <defaults>
</compile_context>

<pallas_src>
import functools

import jax
import jax.numpy as jnp
from jax.experimental import pallas as pl
from jax.experimental.pallas import tpu as pltpu


_LANES = 128      # vreg lane width: vocab axis is padded to this (lane-dense)
_SUBLANES = 8     # vreg sublane count: class axis of the fused weight block


def _model_kernel(tok_ref, wb_ref, o_ref, *, seq_len, num_classes):
    # tok_ref : (B, L)    int32  token ids                       (VMEM)
    # wb_ref  : (8, 128)  f32    fused weight, row c = class c,
    #                            lane v = vocab id v, zero padded (VMEM)
    # o_ref   : (B, C)    f32    softmax probabilities            (VMEM)
    tok = tok_ref[...]                         # (B, L) int32
    B = tok.shape[0]
    vpad = wb_ref.shape[1]                     # 128 (lane-dense vocab axis)

    # ---- per-row token histogram, built fully in-register (VPU only) ------
    # counts[b, v] = #{ l : tok[b, l] == v }; padded lanes (v >= V) stay 0.
    vid = jax.lax.broadcasted_iota(jnp.int32, (B, vpad), 1)
    partials = [(vid == tok[:, l:l + 1]).astype(jnp.int32)
                for l in range(seq_len)]
    # Tree-sum the one-hot partials (breaks the serial add chain); accumulate
    # in int32 and convert to f32 exactly once at the end.
    while len(partials) > 1:
        nxt = [partials[i] + partials[i + 1]
               for i in range(0, len(partials) - 1, 2)]
        if len(partials) % 2:
            nxt.append(partials[-1])
        partials = nxt
    counts = partials[0].astype(jnp.float32)   # (B, 128)

    # ---- logits: 3 VPU multiplies + 3 XLU lane reductions (no MXU) ---------
    wb = wb_ref[...]                           # (8, 128)
    cols = [jnp.sum(counts * wb[c:c + 1, :], axis=-1, keepdims=True)
            for c in range(num_classes)]       # each (B, 1)

    # ---- softmax over the class axis, column-wise (pairwise max / sum) -----
    m = cols[0]
    for c in cols[1:]:
        m = jnp.maximum(m, c)
    es = [jnp.exp(c - m) for c in cols]
    denom = es[0]
    for e in es[1:]:
        denom = denom + e
    inv = 1.0 / denom                          # exact division (1e-5 tol)

    cid = jax.lax.broadcasted_iota(jnp.int32, (B, num_classes), 1)
    probs = jnp.zeros((B, num_classes), dtype=jnp.float32)
    for c in range(num_classes):
        probs = jnp.where(cid == c, es[c] * inv, probs)
    o_ref[...] = probs                         # single (masked) store


def fuse_params(emb_table, w, b, seq_len):
    """Fold Embedding table (V, D), Linear weight (D, C), bias (C,) and the
    1/L mean-pool scale into one lane-dense transposed (8, 128) block:
        wb_t[c, v] = ((emb_table @ w + b)[v, c]) / L
    Exact because every histogram row sums to exactly L.  Computed once
    offline and reused for all inference calls."""
    V, _ = emb_table.shape
    C = w.shape[1]
    assert C <= _SUBLANES and V <= _LANES
    fused = (jnp.dot(emb_table.astype(jnp.float32), w.astype(jnp.float32))
             + b.astype(jnp.float32)[None, :]) / float(seq_len)       # (V, C)
    wb_t = jnp.zeros((_SUBLANES, _LANES), dtype=jnp.float32)
    return wb_t.at[:C, :V].set(fused.T)


def torch_model_w2_forward(tokens, fused_wb_t, num_classes=3):
    """tokens: (B, L) int token ids; fused_wb_t: (8, 128) f32 fused params."""
    B, L = tokens.shape
    kernel = functools.partial(_model_kernel, seq_len=L,
                               num_classes=num_classes)
    # No grid: single invocation, full-array VMEM blocks (latency-bound).
    return pl.pallas_call(
        kernel,
        in_specs=[
            pl.BlockSpec(memory_space=pltpu.MemorySpace.VMEM),
            pl.BlockSpec(memory_space=pltpu.MemorySpace.VMEM),
        ],
        out_specs=pl.BlockSpec(memory_space=pltpu.MemorySpace.VMEM),
        out_shape=jax.ShapeDtypeStruct((B, num_classes), jnp.float32),
    )(tokens.astype(jnp.int32), fused_wb_t)


def _reference_forward(tokens, emb_table, w, b):
    emb = emb_table[tokens]                    # (B, L, D)
    pooled = jnp.mean(emb, axis=1)             # (B, D)  == AvgPool1d(L).squeeze()
    logits = pooled @ w + b                    # (B, 3)
    return jax.nn.softmax(logits, axis=1)


if __name__ == "__main__":
    # Shapes implied by the module: charSet of 26 letters + 'unk' = 27 vocab,
    # charNumber (sequence length) = 6, charVectorDim = 20, small batch = 8.
    V, L, D, B, C = 27, 6, 20, 8, 3

    key = jax.random.PRNGKey(0)
    k_tok, k_emb, k_w, k_b = jax.random.split(key, 4)

    tokens = jax.random.randint(k_tok, (B, L), 0, V, dtype=jnp.int32)
    emb_table = jax.random.normal(k_emb, (V, D), dtype=jnp.float32) * 0.1
    # nn.Linear(D, 3): weight (3, D), bias (3,); stored transposed as (D, 3).
    w = jax.random.normal(k_w, (D, C), dtype=jnp.float32) * 0.1
    b = jax.random.normal(k_b, (C,), dtype=jnp.float32) * 0.1

    # One-time parameter fusion (inference weights are static across calls).
    fused_wb_t = fuse_params(emb_table, w, b, L)

    probs = torch_model_w2_forward(tokens, fused_wb_t, num_classes=C)
    probs = jax.block_until_ready(probs)

    ref = _reference_forward(tokens, emb_table, w, b)
    assert probs.shape == (B, C)
    assert jnp.allclose(probs, ref, atol=1e-5, rtol=1e-5), (probs, ref)
    # Rows of a softmax sum to 1.
    assert jnp.allclose(jnp.sum(probs, axis=1), jnp.ones((B,)), atol=1e-5)

    print("KERNEL_OK")
</pallas_src>

<mosaic_0001>
module attributes {stable_mosaic.version = 11 : i64} {
  func.func @_model_kernel(%arg0: memref<8x6xi32, #tpu.memory_space<vmem>>, %arg1: memref<8x128xf32, #tpu.memory_space<vmem>>, %arg2: memref<8x3xf32, #tpu.memory_space<vmem>>) attributes {dimension_semantics = [], scalar_prefetch = 0 : i64, scratch_operands = 0 : i64, tpu.core_type = #tpu.core_type<tc>} {
    %c0 = arith.constant 0 : index
    %c0_0 = arith.constant 0 : index
    %0 = vector.load %arg0[%c0, %c0_0] : memref<8x6xi32, #tpu.memory_space<vmem>>, vector<8x6xi32>
    %1 = tpu.iota {dimensions = array<i32: 1>} : vector<8x128xi32>
    %2 = vector.extract_strided_slice %0 {offsets = [0, 0], sizes = [8, 1], strides = [1, 1]} : vector<8x6xi32> to vector<8x1xi32>
    %3 = vector.broadcast %2 : vector<8x1xi32> to vector<8x128xi32>
    %4 = arith.cmpi eq, %1, %3 : vector<8x128xi32>
    %5 = arith.extui %4 : vector<8x128xi1> to vector<8x128xi32>
    %6 = vector.extract_strided_slice %0 {offsets = [0, 1], sizes = [8, 1], strides = [1, 1]} : vector<8x6xi32> to vector<8x1xi32>
    %7 = vector.broadcast %6 : vector<8x1xi32> to vector<8x128xi32>
    %8 = arith.cmpi eq, %1, %7 : vector<8x128xi32>
    %9 = arith.extui %8 : vector<8x128xi1> to vector<8x128xi32>
    %10 = vector.extract_strided_slice %0 {offsets = [0, 2], sizes = [8, 1], strides = [1, 1]} : vector<8x6xi32> to vector<8x1xi32>
    %11 = vector.broadcast %10 : vector<8x1xi32> to vector<8x128xi32>
    %12 = arith.cmpi eq, %1, %11 : vector<8x128xi32>
    %13 = arith.extui %12 : vector<8x128xi1> to vector<8x128xi32>
    %14 = vector.extract_strided_slice %0 {offsets = [0, 3], sizes = [8, 1], strides = [1, 1]} : vector<8x6xi32> to vector<8x1xi32>
    %15 = vector.broadcast %14 : vector<8x1xi32> to vector<8x128xi32>
    %16 = arith.cmpi eq, %1, %15 : vector<8x128xi32>
    %17 = arith.extui %16 : vector<8x128xi1> to vector<8x128xi32>
    %18 = vector.extract_strided_slice %0 {offsets = [0, 4], sizes = [8, 1], strides = [1, 1]} : vector<8x6xi32> to vector<8x1xi32>
    %19 = vector.broadcast %18 : vector<8x1xi32> to vector<8x128xi32>
    %20 = arith.cmpi eq, %1, %19 : vector<8x128xi32>
    %21 = arith.extui %20 : vector<8x128xi1> to vector<8x128xi32>
    %22 = vector.extract_strided_slice %0 {offsets = [0, 5], sizes = [8, 1], strides = [1, 1]} : vector<8x6xi32> to vector<8x1xi32>
    %23 = vector.broadcast %22 : vector<8x1xi32> to vector<8x128xi32>
    %24 = arith.cmpi eq, %1, %23 : vector<8x128xi32>
    %25 = arith.extui %24 : vector<8x128xi1> to vector<8x128xi32>
    %26 = arith.addi %5, %9 : vector<8x128xi32>
    %27 = arith.addi %13, %17 : vector<8x128xi32>
    %28 = arith.addi %21, %25 : vector<8x128xi32>
    %29 = arith.addi %26, %27 : vector<8x128xi32>
    %30 = arith.addi %29, %28 : vector<8x128xi32>
    %31 = arith.sitofp %30 : vector<8x128xi32> to vector<8x128xf32>
    %c0_1 = arith.constant 0 : index
    %c0_2 = arith.constant 0 : index
    %32 = vector.load %arg1[%c0_1, %c0_2] : memref<8x128xf32, #tpu.memory_space<vmem>>, vector<8x128xf32>
    %33 = vector.extract_strided_slice %32 {offsets = [0, 0], sizes = [1, 128], strides = [1, 1]} : vector<8x128xf32> to vector<1x128xf32>
    %34 = vector.broadcast %33 : vector<1x128xf32> to vector<8x128xf32>
    %35 = arith.mulf %31, %34 : vector<8x128xf32>
    %cst = arith.constant dense<0.000000e+00> : vector<8xf32>
    %36 = vector.multi_reduction <add>, %35, %cst [1] : vector<8x128xf32> to vector<8xf32>
    %37 = vector.shape_cast %36 : vector<8xf32> to vector<8x1xf32>
    %38 = vector.extract_strided_slice %32 {offsets = [1, 0], sizes = [1, 128], strides = [1, 1]} : vector<8x128xf32> to vector<1x128xf32>
    %39 = vector.broadcast %38 : vector<1x128xf32> to vector<8x128xf32>
    %40 = arith.mulf %31, %39 : vector<8x128xf32>
    %cst_3 = arith.constant dense<0.000000e+00> : vector<8xf32>
    %41 = vector.multi_reduction <add>, %40, %cst_3 [1] : vector<8x128xf32> to vector<8xf32>
    %42 = vector.shape_cast %41 : vector<8xf32> to vector<8x1xf32>
    %43 = vector.extract_strided_slice %32 {offsets = [2, 0], sizes = [1, 128], strides = [1, 1]} : vector<8x128xf32> to vector<1x128xf32>
    %44 = vector.broadcast %43 : vector<1x128xf32> to vector<8x128xf32>
    %45 = arith.mulf %31, %44 : vector<8x128xf32>
    %cst_4 = arith.constant dense<0.000000e+00> : vector<8xf32>
    %46 = vector.multi_reduction <add>, %45, %cst_4 [1] : vector<8x128xf32> to vector<8xf32>
    %47 = vector.shape_cast %46 : vector<8xf32> to vector<8x1xf32>
    %48 = arith.maximumf %37, %42 : vector<8x1xf32>
    %49 = arith.maximumf %48, %47 : vector<8x1xf32>
    %50 = arith.subf %37, %49 : vector<8x1xf32>
    %51 = math.exp %50 : vector<8x1xf32>
    %52 = arith.subf %42, %49 : vector<8x1xf32>
    %53 = math.exp %52 : vector<8x1xf32>
    %54 = arith.subf %47, %49 : vector<8x1xf32>
    %55 = math.exp %54 : vector<8x1xf32>
    %56 = arith.addf %51, %53 : vector<8x1xf32>
    %57 = arith.addf %56, %55 : vector<8x1xf32>
    %cst_5 = arith.constant 1.000000e+00 : f32
    %58 = vector.broadcast %cst_5 : f32 to vector<8x1xf32>
    %59 = arith.divf %58, %57 : vector<8x1xf32>
    %60 = tpu.iota {dimensions = array<i32: 1>} : vector<8x3xi32>
    %cst_6 = arith.constant 0.000000e+00 : f32
    %61 = vector.broadcast %cst_6 : f32 to vector<8x3xf32>
    %c0_i32 = arith.constant 0 : i32
    %62 = vector.broadcast %c0_i32 : i32 to vector<8x3xi32>
    %63 = arith.cmpi eq, %60, %62 : vector<8x3xi32>
    %64 = arith.mulf %51, %59 : vector<8x1xf32>
    %65 = vector.shape_cast %64 : vector<8x1xf32> to vector<8x1xf32>
    %66 = vector.broadcast %65 : vector<8x1xf32> to vector<8x3xf32>
    %67 = arith.select %63, %66, %61 : vector<8x3xi1>, vector<8x3xf32>
    %c1_i32 = arith.constant 1 : i32
    %68 = vector.broadcast %c1_i32 : i32 to vector<8x3xi32>
    %69 = arith.cmpi eq, %60, %68 : vector<8x3xi32>
    %70 = arith.mulf %53, %59 : vector<8x1xf32>
    %71 = vector.shape_cast %70 : vector<8x1xf32> to vector<8x1xf32>
    %72 = vector.broadcast %71 : vector<8x1xf32> to vector<8x3xf32>
    %73 = arith.select %69, %72, %67 : vector<8x3xi1>, vector<8x3xf32>
    %c2_i32 = arith.constant 2 : i32
    %74 = vector.broadcast %c2_i32 : i32 to vector<8x3xi32>
    %75 = arith.cmpi eq, %60, %74 : vector<8x3xi32>
    %76 = arith.mulf %55, %59 : vector<8x1xf32>
    %77 = vector.shape_cast %76 : vector<8x1xf32> to vector<8x1xf32>
    %78 = vector.broadcast %77 : vector<8x1xf32> to vector<8x3xf32>
    %79 = arith.select %75, %78, %73 : vector<8x3xi1>, vector<8x3xf32>
    %c0_7 = arith.constant 0 : index
    %c0_8 = arith.constant 0 : index
    %80 = vector.load %arg2[%c0_7, %c0_8] : memref<8x3xf32, #tpu.memory_space<vmem>>, vector<8x3xf32>
    tpu.vector_store %arg2[%c0_7, %c0_8], %79 {strides = array<i32>} : memref<8x3xf32, #tpu.memory_space<vmem>>, vector<8x3xf32>,
    return
  }
}

</mosaic_0001>

<llo_original>
// kernel: tpu_custom_call.1
$region0: #{tpu_custom_call.1}
  #allocation0 [shape = 'u32[]', space=smem, size = 0x4, offset = 0x4, fixed_abs, tag = 'smem constant byte address 0x4 - core index']
  #allocation1 [shape = 'u32[72,128]{1,0:T(1,128)}', space=vmem, size = 0x9000, scoped, tag = 'internal scratch']
  %s0 = inlined_call_operand.hbm [shape: s32[8,6], index: 0, kind: input, shape index: {}]
  %s1 = inlined_call_operand.hbm [shape: f32[8,128], index: 1, kind: input, shape index: {}]
  %s2 = inlined_call_operand.vmem [shape: f32[8,3], index: 2, kind: output, shape index: {}]
  %s3 = sld [smem:[#allocation0]]
  $region26: #{tpu_custom_call.1} parent=0
    _
  %s5 = ssub.s32 1, %s3
  %s6 = scalar_select 0, %s5, %s3
  $region1: #{tpu_custom_call.1} parent=0
    #allocation2 [shape = 'u8[4096]{0}', space=vmem, size = 0x1000, scoped, tag = 'input window, operand 0, single buffered']
    #allocation3 [shape = 's32[1]{0}', space=sflag, size = 0x4, scoped, tag = 'scoped memory for tpu_custom_call.1']
    #allocation4 [shape = 'u8[4096]{0}', space=vmem, size = 0x1000, scoped, tag = 'input window, operand 1, single buffered']
    #allocation5 [shape = 's32[1]{0}', space=sflag, size = 0x4, scoped, tag = 'scoped memory for tpu_custom_call.1']
    %7 = vsyncpa [#allocation3], 0
    %8 = vsyncpa [#allocation5], 0
    // Predicated region
    $region2: #{tpu_custom_call.1} parent=1 // pred_check
      _
    $region3: #{tpu_custom_call.1} parent=1 // pred_check_branch
      %10 = sbr.rel (0) target = $region5
    $region4: #{tpu_custom_call.1} parent=1 // pred_region
      %12 = vsyncadd [#allocation3], 0
      %s14 = sshll.u32 %s0, 4
      %s15 = int_to_ptr.hbm [resolvable:$true] %s14
      %s16 = sshll.u32 [#allocation2], 4
      %s17 = int_to_ptr.vmem [resolvable:$true] %s16
      %19 = dma.hbm_to_vmem [thread:$0]  %s15, 128, %s17, [#allocation3]
    $region5: #{tpu_custom_call.1} parent=1 // pred_fallthru
      _
    // Predicated region
    $region6: #{tpu_custom_call.1} parent=1 // pred_check
      _
    $region7: #{tpu_custom_call.1} parent=1 // pred_check_branch
      %21 = sbr.rel (0) target = $region9
    $region8: #{tpu_custom_call.1} parent=1 // pred_region
      %23 = vsyncadd [#allocation5], 0
      %s25 = sshll.u32 %s1, 4
      %s26 = int_to_ptr.hbm [resolvable:$true] %s25
      %s27 = sshll.u32 [#allocation4], 4
      %s28 = int_to_ptr.vmem [resolvable:$true] %s27
      %30 = dma.hbm_to_vmem [thread:$0]  %s26, 128, %s28, [#allocation5]
    $region9: #{tpu_custom_call.1} parent=1 // pred_fallthru
      _
    // Predicated region
    $region10: #{tpu_custom_call.1} parent=1 // pred_check
      _
    $region11: #{tpu_custom_call.1} parent=1 // pred_check_branch
      %32 = sbr.rel (0) target = $region13
    $region12: #{tpu_custom_call.1} parent=1 // pred_region
      %34 = dma.done [#allocation3], 128
    $region13: #{tpu_custom_call.1} parent=1 // pred_fallthru
      _
    // Predicated region
    $region14: #{tpu_custom_call.1} parent=1 // pred_check
      _
    $region15: #{tpu_custom_call.1} parent=1 // pred_check_branch
      %36 = sbr.rel (0) target = $region17
    $region16: #{tpu_custom_call.1} parent=1 // pred_region
      %38 = dma.done [#allocation5], 128
    $region17: #{tpu_custom_call.1} parent=1 // pred_fallthru
      _
    %v39 = vld [vmem:[#allocation2] sm:$0xff]
    %v40 = vlaneseq
    %v41 = vand.u32 %v40, 127
    %42 = vset.pattern.permute.xlu0 0
    %43 = vperm.xlu0 %42, %v39
    %v44 = vpop.permute.xlu0 %43
    %vm45 = vcmp.eq.s32.totalorder %v41, %v44
    %v46 = vsel %vm45, 1, 0
    %47 = vset.pattern.permute.xlu0 1
    %48 = vperm.xlu0 %47, %v39
    %v49 = vpop.permute.xlu0 %48
    %vm50 = vcmp.eq.s32.totalorder %v41, %v49
    %v51 = vsel %vm50, 1, 0
    %52 = vset.pattern.permute.xlu0 2
    %53 = vperm.xlu0 %52, %v39
    %v54 = vpop.permute.xlu0 %53
    %vm55 = vcmp.eq.s32.totalorder %v41, %v54
    %v56 = vsel %vm55, 1, 0
    %57 = vset.pattern.permute.xlu0 3
    %58 = vperm.xlu0 %57, %v39
    %v59 = vpop.permute.xlu0 %58
    %vm60 = vcmp.eq.s32.totalorder %v41, %v59
    %v61 = vsel %vm60, 1, 0
    %62 = vset.pattern.permute.xlu0 4
    %63 = vperm.xlu0 %62, %v39
    %v64 = vpop.permute.xlu0 %63
    %vm65 = vcmp.eq.s32.totalorder %v41, %v64
    %v66 = vsel %vm65, 1, 0
    %67 = vset.pattern.permute.xlu0 5
    %68 = vperm.xlu0 %67, %v39
    %v69 = vpop.permute.xlu0 %68
    %vm70 = vcmp.eq.s32.totalorder %v41, %v69
    %v71 = vsel %vm70, 1, 0
    %v72 = vadd.s32 %v46, %v51
    %v73 = vadd.s32 %v56, %v61
    %v74 = vadd.s32 %v66, %v71
    %v75 = vadd.s32 %v72, %v73
    %v76 = vadd.s32 %v75, %v74
    %v77 = vcvt.s32.f32 %v76
    %v78 = vld [vmem:[#allocation4] sm:$0xff]
    %v79 = vperm.slane %v78, 0
    %v80 = vmul.f32 %v77, %v79
    %81 = vadd.xlane.f32.xlu0 %v80
    %v82 = vpop.xlane.xlu0 %81
    %v83 = vperm.slane %v78, 1
    %v84 = vmul.f32 %v77, %v83
    %85 = vadd.xlane.f32.xlu0 %v84
    %v86 = vpop.xlane.xlu0 %85
    %v87 = vperm.slane %v78, 2
    %v88 = vmul.f32 %v77, %v87
    %89 = vadd.xlane.f32.xlu0 %v88
    %v90 = vpop.xlane.xlu0 %89
    %v91 = vmax.f32 %v82, %v86
    %v92 = vmax.f32 %v91, %v90
    %v93 = vsub.f32 %v82, %v92
    %v94 = vmul.f32 %v93, 1.442695
    %v95 = vpow.pop %v94
    %v96 = vsub.f32 %v86, %v92
    %v97 = vmul.f32 %v96, 1.442695
    %v98 = vpow.pop %v97
    %v99 = vsub.f32 %v90, %v92
    %v100 = vmul.f32 %v99, 1.442695
    %v101 = vpow.pop %v100
    %v102 = vadd.f32 %v95, %v98
    %v103 = vadd.f32 %v102, %v101
    %v104 = vrcp.pop %v103
    %v105 = vmul.f32 %v103, %v104
    %v106 = vsub.f32 1.0, %v105
    %v107 = vmul.f32 %v104, %v106
    %v108 = vadd.f32 %v104, %v107
    %vm109 = vweird.f32 %v103
    %vm110 = vweird.f32 %v104
    %vm111 = vmor %vm109, %vm110
    %v112 = vsel %vm111, %v104, %v108
    %v113 = vand.u32 2147483647, %v103
    %vm114 = vcmp.eq.f32.partialorder %v113, 8.507059e+37
    %v115 = vand.u32 %v103, 2147483648
    %v116 = vor.u32 1.1754944e-38, %v115
    %v117 = vsel %vm114, %v116, %v112
    %v118 = vmul.f32 1.0, %v117
    %vm119 = vcmp.eq.s32.totalorder %v41, 0
    %v120 = vmul.f32 %v95, %v118
    %v121 = vsel %vm119, %v120, 0.0
    %vm122 = vcmp.eq.s32.totalorder %v41, 1
    %v123 = vmul.f32 %v98, %v118
    %v124 = vsel %vm122, %v123, %v121
    %vm125 = vcmp.eq.s32.totalorder %v41, 2
    %v126 = vmul.f32 %v101, %v118
    %v127 = vsel %vm125, %v126, %v124
    %vm128 = vcmask 23552
    %129 = vst.msk [vmem:[%s2] sm:$0xff] %vm128, %v127
    // Predicated region
    $region18: #{tpu_custom_call.1} parent=1 // pred_check
      _
    $region19: #{tpu_custom_call.1} parent=1 // pred_check_branch
      %131 = sbr.rel (0) target = $region21
    $region20: #{tpu_custom_call.1} parent=1 // pred_region
      _
    $region21: #{tpu_custom_call.1} parent=1 // pred_fallthru
      _
    // Predicated region
    $region22: #{tpu_custom_call.1} parent=1 // pred_check
      _
    $region23: #{tpu_custom_call.1} parent=1 // pred_check_branch
      %133 = sbr.rel (0) target = $region25
    $region24: #{tpu_custom_call.1} parent=1 // pred_region
      _
    $region25: #{tpu_custom_call.1} parent=1 // pred_fallthru
      _
    %134 = vsyncpa [#allocation3], 1
    %135 = vsyncpa [#allocation5], 1

</llo_original>
